<compile_context>
chip_gen: v7x
topology: tpu7x:2x2x1
jax: 0.10.0
libtpu: 0.0.40
codegen_flags: <defaults>
</compile_context>

<pallas_src>
import functools

import numpy as np
import jax
import jax.numpy as jnp
from jax.experimental import pallas as pl
from jax.experimental.pallas import tpu as pltpu

# Standard Daubechies orthogonal scaling (lowpass) filters, db1..db5.
DB_FILTERS = {
    1: [0.7071067811865476, 0.7071067811865476],
    2: [0.48296291314469025, 0.836516303737469,
        0.22414386804185735, -0.12940952255092145],
    3: [0.3326705529509569, 0.8068915093133388, 0.4598775021193313,
        -0.13501102001039084, -0.08544127388224149, 0.035226291882100656],
    4: [0.23037781330885523, 0.7148465705525415, 0.6308807679295904,
        -0.02798376941698385, -0.18703481171888114, 0.030841381835986965,
        0.032883011666982945, -0.010597401784997278],
    5: [0.160102397974125, 0.6038292697974729, 0.7243085284385744,
        0.13842814590110342, -0.24229488706619015, -0.03224486958502952,
        0.07757149384006515, -0.006241490213011705, -0.012580751999015526,
        0.003335725285001549],
}


def _analysis_matrix(h, n):
    """Orthogonal single-level DWT matrix (periodic extension), shape (n, n)."""
    h = np.asarray(h, dtype=np.float64)
    L = len(h)
    g = np.array([(-1.0) ** j * h[L - 1 - j] for j in range(L)])  # QMF highpass
    A = np.zeros((n, n), dtype=np.float64)
    half = n // 2
    for i in range(half):
        for j in range(L):
            col = (2 * i + j) % n
            A[i, col] += h[j]            # lowpass rows
            A[half + i, col] += g[j]     # highpass rows
    return A.astype(np.float32)


def _subband_index(H, W):
    """(H, W) int map of subband id in {0:LL, 1:LH, 2:HL, 3:HH} over DWT coeffs."""
    # TODO(synk): cop.DWT's subband stacking order is assumed, not known.
    r = (np.arange(H) >= H // 2).astype(np.int32)
    c = (np.arange(W) >= W // 2).astype(np.int32)
    return 2 * r[:, None] + c[None, :]


def _block_kernel(x_ref, w1_ref, w2_ref, o_ref, *, lam):
    """One (G, H*W) batch of flattened images per grid step."""
    xb = x_ref[...]                                           # (G, HW) bf16
    # Scaled DWT (per-subband scale folded into w1), bf16 operands, f32 acc.
    c = jnp.dot(xb, w1_ref[...], preferred_element_type=jnp.float32)
    # Softshrink(lam): s(z) = z - clip(z, -lam, lam)  (f32 VPU)
    alpha = c - jnp.clip(c, -lam, lam)
    # IDWT of the shrunk coefficients.
    y = jnp.dot(alpha.astype(jnp.bfloat16), w2_ref[...],
                preferred_element_type=jnp.float32)           # (G, HW) f32
    # Forward returns idwt(alpha) - x.
    o_ref[...] = (y - xb.astype(jnp.float32)).astype(o_ref.dtype)


def _round_up(a, m):
    return -(-a // m) * m


def block_forward(x, param, wave_type="db2", param_shrink=0.5):
    """x: (N, C, H, W) float32; param: (4, 1, 1, 1, 1) learnable subband scales."""
    N, C, H, W = x.shape
    assert H % 2 == 0 and W % 2 == 0, "single-level DWT needs even H, W"
    order = int(str(wave_type).lower().replace("db", ""))
    lam = float(param_shrink)
    HW = H * W
    M = N * C

    # Separable analysis matrices -> single Kronecker operator (c_flat = K @ x_flat).
    ah = _analysis_matrix(DB_FILTERS[order], H)               # (H, H)
    aw = _analysis_matrix(DB_FILTERS[order], W)               # (W, W)
    K = np.kron(ah, aw).astype(np.float32)                    # (HW, HW)

    # Fold the per-subband scale into the analysis operator (host-side, free).
    band = _subband_index(H, W).reshape(-1)                   # (HW,) in {0..3}
    s_vec = param.reshape(-1)[band].astype(jnp.float32)       # (HW,)
    w1 = (jnp.asarray(K.T) * s_vec[None, :]).astype(jnp.bfloat16)  # scaled DWT op
    w2 = jnp.asarray(K, dtype=jnp.bfloat16)                        # IDWT op

    # bf16 image input (kernel is HBM-bound at HW=256 on every generation).
    x2d = x.reshape(M, HW).astype(jnp.bfloat16)

    # Row batching: target 256 rows/step (fills v6e/v7x 256-wide MXU; fine on
    # v5e); guarantee >= 2 grid steps so "parallel" shards across v7x's 2 TCs.
    G_target = 256
    if M >= 2 * G_target:
        G = G_target
    else:
        G = max(8, min(G_target, _round_up(max(1, -(-M // 2)), 8)))
    Mp = _round_up(M, G)
    if Mp // G < 2:
        Mp = 2 * G
    if Mp != M:
        x2d = jnp.pad(x2d, ((0, Mp - M), (0, 0)))

    try:
        phys_vmem = int(pltpu.get_tpu_info().vmem_capacity_bytes)
    except Exception:
        phys_vmem = 64 * 1024 * 1024                          # v7x per-TC floor

    cost = pl.CostEstimate(
        flops=4 * Mp * HW * HW,                               # two (G,HW)x(HW,HW) matmuls / row
        transcendentals=0,
        bytes_accessed=Mp * HW * 2 + Mp * HW * 4 + 2 * HW * HW * 2)

    def _call(single_buffer_ops):
        op_kwargs = {"pipeline_mode": pl.Buffered(1)} if single_buffer_ops else {}
        n_op_bufs = 1 if single_buffer_ops else 2
        needed = (2 * G * HW * 2                              # bf16 input blocks (double-buffered)
                  + 2 * G * HW * 4                            # f32 output blocks (double-buffered)
                  + n_op_bufs * 2 * HW * HW * 2               # the two bf16 operators
                  + 4 * G * HW * 4                            # f32 temporaries in the body
                  + (8 << 20))                                # compiler headroom
        vmem_limit = int(max(16 << 20, min(needed, int(0.85 * phys_vmem))))
        out = pl.pallas_call(
            functools.partial(_block_kernel, lam=lam),
            out_shape=jax.ShapeDtypeStruct((Mp, HW), jnp.float32),
            grid=(Mp // G,),
            in_specs=[
                pl.BlockSpec((G, HW), lambda i: (i, 0)),      # image rows (bf16)
                pl.BlockSpec((HW, HW), lambda i: (0, 0), **op_kwargs),  # scaled DWT op
                pl.BlockSpec((HW, HW), lambda i: (0, 0), **op_kwargs),  # IDWT op
            ],
            out_specs=pl.BlockSpec((G, HW), lambda i: (i, 0)),
            compiler_params=pltpu.CompilerParams(
                dimension_semantics=("parallel",),
                vmem_limit_bytes=vmem_limit),
            cost_estimate=cost,
        )(x2d, w1, w2)
        return jax.block_until_ready(out)

    try:
        out2d = _call(True)                                   # single-buffer invariant operators
    except Exception:
        # TODO(synk): pipeline_mode=pl.Buffered(1) not supported on this jax;
        # fall back to default double-buffering (2x operator VMEM).
        out2d = _call(False)

    return out2d[:M].reshape(N, C, H, W).astype(x.dtype)


def _reference(x, param, wave_type, param_shrink):
    """Pure-JAX f32 reference mirroring the PyTorch forward (same wavelet matrices)."""
    N, C, H, W = x.shape
    order = int(str(wave_type).lower().replace("db", ""))
    lam = float(param_shrink)
    ah = jnp.asarray(_analysis_matrix(DB_FILTERS[order], H))
    aw = jnp.asarray(_analysis_matrix(DB_FILTERS[order], W))
    c = jnp.einsum('ai,ncij,bj->ncab', ah, x, aw)             # DWT coefficients
    s = param.reshape(-1)[_subband_index(H, W)]               # (H, W) subband scales
    scaled = s[None, None] * c
    alpha = scaled - jnp.clip(scaled, -lam, lam)              # Softshrink
    y = jnp.einsum('ai,ncab,bj->ncij', ah, alpha, aw)         # IDWT (A orthogonal)
    return y - x


if __name__ == "__main__":
    wave_type, param_shrink = "db2", 0.5
    key = jax.random.PRNGKey(0)
    kx, kp = jax.random.split(key)
    x = jax.random.normal(kx, (2, 4, 16, 16), dtype=jnp.float32)
    # torch.rand((4, 1, 1, 1, 1)) analogue: uniform [0, 1)
    param = jax.random.uniform(kp, (4, 1, 1, 1, 1), dtype=jnp.float32)

    ref = _reference(x, param, wave_type, param_shrink)

    out = block_forward(x, param, wave_type, param_shrink)
    out = jax.block_until_ready(out)

    # Tolerance covers bf16 image I/O and bf16 matmul operands (f32 accumulation).
    np.testing.assert_allclose(np.asarray(out), np.asarray(ref), rtol=5e-2, atol=5e-2)
    print("KERNEL_OK")
</pallas_src>

<mosaic_0001>
module attributes {stable_mosaic.version = 11 : i64} {
  func.func @_block_kernel(%arg0: i32, %arg1: memref<8x256xbf16, #tpu.memory_space<vmem>>, %arg2: memref<256x256xbf16, #tpu.memory_space<vmem>>, %arg3: memref<256x256xbf16, #tpu.memory_space<vmem>>, %arg4: memref<8x256xf32, #tpu.memory_space<vmem>>) attributes {dimension_semantics = [#tpu.dimension_semantics<parallel>], iteration_bounds = array<i64: 2>, scalar_prefetch = 0 : i64, scratch_operands = 0 : i64, tpu.core_type = #tpu.core_type<tc>, window_params = [{transform_indices = @transform_0, window_bounds = array<i64: 8, 256>}, {pipeline_mode = #tpu.pipeline_mode<synchronous>, transform_indices = @transform_1, window_bounds = array<i64: 256, 256>}, {pipeline_mode = #tpu.pipeline_mode<synchronous>, transform_indices = @transform_2, window_bounds = array<i64: 256, 256>}, {transform_indices = @transform_3, window_bounds = array<i64: 8, 256>}]} {
    %c0 = arith.constant 0 : index
    %c0_0 = arith.constant 0 : index
    %0 = vector.load %arg1[%c0, %c0_0] : memref<8x256xbf16, #tpu.memory_space<vmem>>, vector<8x256xbf16>
    %c0_1 = arith.constant 0 : index
    %c0_2 = arith.constant 0 : index
    %1 = vector.load %arg2[%c0_1, %c0_2] : memref<256x256xbf16, #tpu.memory_space<vmem>>, vector<256x256xbf16>
    %cst = arith.constant dense<0.000000e+00> : vector<8x256xf32>
    %2 = tpu.matmul %0, %1, %cst {dimension_numbers = #tpu.dot_dimension_numbers<[1], [0], [0], [1], [0, 0, 1, 1], [], []>} : vector<8x256xbf16>, vector<256x256xbf16>, vector<8x256xf32> -> vector<8x256xf32>
    %cst_3 = arith.constant -5.000000e-01 : f32
    %cst_4 = arith.constant 5.000000e-01 : f32
    %3 = vector.broadcast %cst_3 : f32 to vector<8x256xf32>
    %4 = arith.maximumf %3, %2 : vector<8x256xf32>
    %5 = vector.broadcast %cst_4 : f32 to vector<8x256xf32>
    %6 = arith.minimumf %5, %4 : vector<8x256xf32>
    %7 = arith.subf %2, %6 : vector<8x256xf32>
    %8 = arith.truncf %7 : vector<8x256xf32> to vector<8x256xbf16>
    %c0_5 = arith.constant 0 : index
    %c0_6 = arith.constant 0 : index
    %9 = vector.load %arg3[%c0_5, %c0_6] : memref<256x256xbf16, #tpu.memory_space<vmem>>, vector<256x256xbf16>
    %cst_7 = arith.constant dense<0.000000e+00> : vector<8x256xf32>
    %10 = tpu.matmul %8, %9, %cst_7 {dimension_numbers = #tpu.dot_dimension_numbers<[1], [0], [0], [1], [0, 0, 1, 1], [], []>} : vector<8x256xbf16>, vector<256x256xbf16>, vector<8x256xf32> -> vector<8x256xf32>
    %11 = arith.extf %0 : vector<8x256xbf16> to vector<8x256xf32>
    %12 = arith.subf %10, %11 : vector<8x256xf32>
    %c0_8 = arith.constant 0 : index
    %c0_9 = arith.constant 0 : index
    %13 = vector.load %arg4[%c0_8, %c0_9] : memref<8x256xf32, #tpu.memory_space<vmem>>, vector<8x256xf32>
    tpu.vector_store %arg4[%c0_8, %c0_9], %12 {strides = array<i32>} : memref<8x256xf32, #tpu.memory_space<vmem>>, vector<8x256xf32>,
    return
  }
  func.func @transform_0(%arg0: i32) -> (i32, i32) {
    %c0_i32 = arith.constant 0 : i32
    %c0_i32_0 = arith.constant 0 : i32
    return %arg0, %c0_i32 : i32, i32
  }
  func.func @transform_1(%arg0: i32) -> (i32, i32) {
    %c0_i32 = arith.constant 0 : i32
    %c0_i32_0 = arith.constant 0 : i32
    %c0_i32_1 = arith.constant 0 : i32
    return %c0_i32, %c0_i32_0 : i32, i32
  }
  func.func @transform_2(%arg0: i32) -> (i32, i32) {
    %c0_i32 = arith.constant 0 : i32
    %c0_i32_0 = arith.constant 0 : i32
    %c0_i32_1 = arith.constant 0 : i32
    return %c0_i32, %c0_i32_0 : i32, i32
  }
  func.func @transform_3(%arg0: i32) -> (i32, i32) {
    %c0_i32 = arith.constant 0 : i32
    %c0_i32_0 = arith.constant 0 : i32
    return %arg0, %c0_i32 : i32, i32
  }
}

module attributes {stable_mosaic.version = 11 : i64} {
  func.func @_block_kernel(%arg0: i32, %arg1: memref<8x256xbf16, #tpu.memory_space<vmem>>, %arg2: memref<256x256xbf16, #tpu.memory_space<vmem>>, %arg3: memref<256x256xbf16, #tpu.memory_space<vmem>>, %arg4: memref<8x256xf32, #tpu.memory_space<vmem>>) attributes {dimension_semantics = [#tpu.dimension_semantics<parallel>], iteration_bounds = array<i64: 2>, scalar_prefetch = 0 : i64, scratch_operands = 0 : i64, tpu.core_type = #tpu.core_type<tc>, window_params = [{transform_indices = @transform_0, window_bounds = array<i64: 8, 256>}, {pipeline_mode = #tpu.pipeline_mode<synchronous>, transform_indices = @transform_1, window_bounds = array<i64: 256, 256>}, {pipeline_mode = #tpu.pipeline_mode<synchronous>, transform_indices = @transform_2, window_bounds = array<i64: 256, 256>}, {transform_indices = @transform_3, window_bounds = array<i64: 8, 256>}]} {
    %c0 = arith.constant 0 : index
    %c0_0 = arith.constant 0 : index
    %0 = vector.load %arg1[%c0, %c0_0] : memref<8x256xbf16, #tpu.memory_space<vmem>>, vector<8x256xbf16>
    %c0_1 = arith.constant 0 : index
    %c0_2 = arith.constant 0 : index
    %1 = vector.load %arg2[%c0_1, %c0_2] : memref<256x256xbf16, #tpu.memory_space<vmem>>, vector<256x256xbf16>
    %cst = arith.constant dense<0.000000e+00> : vector<8x256xf32>
    %2 = tpu.matmul %0, %1, %cst {dimension_numbers = #tpu.dot_dimension_numbers<[1], [0], [0], [1], [0, 0, 1, 1], [], []>} : vector<8x256xbf16>, vector<256x256xbf16>, vector<8x256xf32> -> vector<8x256xf32>
    %cst_3 = arith.constant -5.000000e-01 : f32
    %cst_4 = arith.constant 5.000000e-01 : f32
    %3 = vector.broadcast %cst_3 : f32 to vector<8x256xf32>
    %4 = arith.maximumf %3, %2 : vector<8x256xf32>
    %5 = vector.broadcast %cst_4 : f32 to vector<8x256xf32>
    %6 = arith.minimumf %5, %4 : vector<8x256xf32>
    %7 = arith.subf %2, %6 : vector<8x256xf32>
    %8 = arith.truncf %7 : vector<8x256xf32> to vector<8x256xbf16>
    %c0_5 = arith.constant 0 : index
    %c0_6 = arith.constant 0 : index
    %9 = vector.load %arg3[%c0_5, %c0_6] : memref<256x256xbf16, #tpu.memory_space<vmem>>, vector<256x256xbf16>
    %cst_7 = arith.constant dense<0.000000e+00> : vector<8x256xf32>
    %10 = tpu.matmul %8, %9, %cst_7 {dimension_numbers = #tpu.dot_dimension_numbers<[1], [0], [0], [1], [0, 0, 1, 1], [], []>} : vector<8x256xbf16>, vector<256x256xbf16>, vector<8x256xf32> -> vector<8x256xf32>
    %11 = arith.extf %0 : vector<8x256xbf16> to vector<8x256xf32>
    %12 = arith.subf %10, %11 : vector<8x256xf32>
    %c0_8 = arith.constant 0 : index
    %c0_9 = arith.constant 0 : index
    %13 = vector.load %arg4[%c0_8, %c0_9] : memref<8x256xf32, #tpu.memory_space<vmem>>, vector<8x256xf32>
    tpu.vector_store %arg4[%c0_8, %c0_9], %12 {strides = array<i32>} : memref<8x256xf32, #tpu.memory_space<vmem>>, vector<8x256xf32>,
    return
  }
  func.func @transform_0(%arg0: i32) -> (i32, i32) {
    %c0_i32 = arith.constant 0 : i32
    %c0_i32_0 = arith.constant 0 : i32
    return %arg0, %c0_i32 : i32, i32
  }
  func.func @transform_1(%arg0: i32) -> (i32, i32) {
    %c0_i32 = arith.constant 0 : i32
    %c0_i32_0 = arith.constant 0 : i32
    %c0_i32_1 = arith.constant 0 : i32
    return %c0_i32, %c0_i32_0 : i32, i32
  }
  func.func @transform_2(%arg0: i32) -> (i32, i32) {
    %c0_i32 = arith.constant 0 : i32
    %c0_i32_0 = arith.constant 0 : i32
    %c0_i32_1 = arith.constant 0 : i32
    return %c0_i32, %c0_i32_0 : i32, i32
  }
  func.func @transform_3(%arg0: i32) -> (i32, i32) {
    %c0_i32 = arith.constant 0 : i32
    %c0_i32_0 = arith.constant 0 : i32
    return %arg0, %c0_i32 : i32, i32
  }
}

</mosaic_0001>

<llo_original>
// kernel: tpu_custom_call.1
$region0: #{tpu_custom_call.1}
  #allocation0 [shape = 'u32[]', space=smem, size = 0x4, offset = 0x4, fixed_abs, tag = 'smem constant byte address 0x4 - core index']
  #allocation1 [shape = 'u32[144,128]{1,0:T(1,128)}', space=vmem, size = 0x12000, scoped, tag = 'internal scratch']
  %s0 = inlined_call_operand.hbm [shape: bf16[16,256], index: 0, kind: input, shape index: {}]
  %s1 = inlined_call_operand.hbm [shape: bf16[256,256], index: 1, kind: input, shape index: {}]
  %s2 = inlined_call_operand.hbm [shape: bf16[256,256], index: 2, kind: input, shape index: {}]
  %s3 = inlined_call_operand.hbm [shape: f32[16,256], index: 3, kind: output, shape index: {}]
  %s4 = sld [smem:[#allocation0]]
  $region57: #{tpu_custom_call.1} parent=0
    _
  %s6 = ssub.s32 1, %s4
  %s7 = scalar_select 0, %s6, %s4
  $region1: #{tpu_custom_call.1} parent=0
    #allocation2 [shape = 'u8[8192]{0}', space=vmem, size = 0x2000, scoped, tag = 'input window, operand 0']
    #allocation3 [shape = 's32[2]{0}', space=sflag, size = 0x8, scoped, tag = 'scoped memory for tpu_custom_call.1']
    #allocation4 [shape = 's32[2]{0}', space=sflag, size = 0x8, scoped, tag = 'scoped memory for tpu_custom_call.1']
    #allocation5 [shape = 'u8[131072]{0}', space=vmem, size = 0x20000, scoped, tag = 'input window, operand 1, single buffered']
    #allocation6 [shape = 's32[1]{0}', space=sflag, size = 0x4, scoped, tag = 'scoped memory for tpu_custom_call.1']
    #allocation7 [shape = 'u8[131072]{0}', space=vmem, size = 0x20000, scoped, tag = 'input window, operand 2, single buffered']
    #allocation8 [shape = 'u8[16384]{0}', space=vmem, size = 0x4000, scoped, tag = 'output window, operand 0']
    %8 = vsyncpa [#allocation3], 0
    %s9 = scalar_lea.sflag [#allocation3], 1
    %10 = vsyncpa %s9, 0
    %11 = vsyncpa [#allocation6], 0
    %12 = vsyncpa [#allocation4], 0
    %s13 = scalar_lea.sflag [#allocation4], 1
    %14 = vsyncpa %s13, 0
    loop: start=0, step=1, limit=4
    $region2: #{tpu_custom_call.1} parent=1 // loop_pre_header
      _
    $region3: #{tpu_custom_call.1} parent=1 // loop_header
      %s16 = sphi 0, %s20
      %p17 = scmp.ge.s32.totalorder %s16, 4
      %s26 = sphi 0, %s28
      %s29 = sphi 0, %s26
      %s30 = sphi 0, %s29
      %s46 = sphi 0, %s30
      %s50 = sphi 0, %s50
      %s52 = sphi 0, %s50
      %s53 = sphi 0, %s52
      %s67 = sphi 0, %s53
      %s71 = sphi 0, %s71
      %s73 = sphi 0, %s71
      %s74 = sphi 0, %s73
      %s88 = sphi 0, %s74
      %s94 = sphi 0, %s96
      %s97 = sphi 0, %s94
      %s98 = sphi 0, %s97
      %s114 = sphi 0, %s98
    $region4: #{tpu_custom_call.1} parent=1 // loop_header_branch
      %19 = sbr.rel (%p17) target = $region8
    $region5: #{tpu_custom_call.1} parent=1 // loop_body
      %s21 = ssub.s32 %s16, 1
      %s22 = ssub.s32 %s16, 2
      %s23 = sadd.s32 %s16, 1
      %s24 = ssub.s32 %s16, %s23
      %p25 = scmp.eq.s32.totalorder %s24, 0
      %s27 = sadd.s32 %s26, 1
      %s28 = scalar_select %p25, %s26, %s27
      %p31 = pneg %p25
      %p32 = scmp.eq.s32.totalorder %s16, 1
      %p33 = por %p31, %p32
      %p34 = scmp.ne.s32.totalorder %s26, %s29
      %p35 = scmp.eq.s32.totalorder %s16, 0
      %p36 = por %p34, %p35
      %p37 = scmp.ne.s32.totalorder %s26, %s29
      %p38 = scmp.eq.s32.totalorder %s21, 1
      %p39 = por %p37, %p38
      %p40 = scmp.ne.s32.totalorder %s29, %s30
      %p41 = scmp.eq.s32.totalorder %s21, 0
      %p42 = por %p40, %p41
      %p43 = scmp.ne.s32.totalorder %s29, %s30
      %p44 = scmp.eq.s32.totalorder %s22, 1
      %p45 = por %p43, %p44
      %p47 = scmp.ne.s32.totalorder %s30, %s46
      %p48 = scmp.eq.s32.totalorder %s22, 0
      %p49 = por %p47, %p48
      %s51 = sadd.s32 %s50, 1
      %p54 = scmp.eq.s32.totalorder %s16, 1
      %p55 = scmp.ne.s32.totalorder %s50, %s52
      %p56 = scmp.eq.s32.totalorder %s16, 0
      %p57 = por %p55, %p56
      %p58 = scmp.ne.s32.totalorder %s50, %s52
      %p59 = scmp.eq.s32.totalorder %s21, 1
      %p60 = por %p58, %p59
      %p61 = scmp.ne.s32.totalorder %s52, %s53
      %p62 = scmp.eq.s32.totalorder %s21, 0
      %p63 = por %p61, %p62
      %p64 = scmp.ne.s32.totalorder %s52, %s53
      %p65 = scmp.eq.s32.totalorder %s22, 1
      %p66 = por %p64, %p65
      %p68 = scmp.ne.s32.totalorder %s53, %s67
      %p69 = scmp.eq.s32.totalorder %s22, 0
      %p70 = por %p68, %p69
      %s72 = sadd.s32 %s71, 1
      %p75 = scmp.eq.s32.totalorder %s16, 1
      %p76 = scmp.ne.s32.totalorder %s71, %s73
      %p77 = scmp.eq.s32.totalorder %s16, 0
      %p78 = por %p76, %p77
      %p79 = scmp.ne.s32.totalorder %s71, %s73
      %p80 = scmp.eq.s32.totalorder %s21, 1
      %p81 = por %p79, %p80
      %p82 = scmp.ne.s32.totalorder %s73, %s74
      %p83 = scmp.eq.s32.totalorder %s21, 0
      %p84 = por %p82, %p83
      %p85 = scmp.ne.s32.totalorder %s73, %s74
      %p86 = scmp.eq.s32.totalorder %s22, 1
      %p87 = por %p85, %p86
      %p89 = scmp.ne.s32.totalorder %s74, %s88
      %p90 = scmp.eq.s32.totalorder %s22, 0
      %p91 = por %p89, %p90
      %s92 = ssub.s32 %s16, %s23
      %p93 = scmp.eq.s32.totalorder %s92, 0
      %s95 = sadd.s32 %s94, 1
      %s96 = scalar_select %p93, %s94, %s95
      %p99 = pneg %p93
      %p100 = scmp.eq.s32.totalorder %s16, 1
      %p101 = por %p99, %p100
      %p102 = scmp.ne.s32.totalorder %s94, %s97
      %p103 = scmp.eq.s32.totalorder %s16, 0
      %p104 = por %p102, %p103
      %p105 = scmp.ne.s32.totalorder %s94, %s97
      %p106 = scmp.eq.s32.totalorder %s21, 1
      %p107 = por %p105, %p106
      %p108 = scmp.ne.s32.totalorder %s97, %s98
      %p109 = scmp.eq.s32.totalorder %s21, 0
      %p110 = por %p108, %p109
      %p111 = scmp.ne.s32.totalorder %s97, %s98
      %p112 = scmp.eq.s32.totalorder %s22, 1
      %p113 = por %p111, %p112
      %p115 = scmp.ne.s32.totalorder %s98, %s114
      %p116 = scmp.eq.s32.totalorder %s22, 0
      %p117 = por %p115, %p116
      %p118 = scmp.le.s32.totalorder 1, %s16
      %p119 = scmp.lt.s32.totalorder %s16, 3
      %p120 = pnand %p118, %p119
      %p121 = pneg %p120
      // Predicated region
      $region9: #{tpu_custom_call.1} parent=5 // pred_check
        _
      $region10: #{tpu_custom_call.1} parent=5 // pred_check_branch
        %123 = sbr.rel (%p120) target = $region12
      $region11: #{tpu_custom_call.1} parent=5 // pred_region
        %s124 = ssub.s32 %s16, 1
        // Predicated region
        $region13: #{tpu_custom_call.1} parent=11 // pred_check
          %p125 = pneg %p63
        $region14: #{tpu_custom_call.1} parent=11 // pred_check_branch
          %127 = sbr.rel (%p125) target = $region16
        $region15: #{tpu_custom_call.1} parent=11 // pred_region
          %s129 = ssub.s32 4096, 4096
          %130 = vsyncadd [#allocation6], %s129
          %s131 = sshll.u32 [#allocation5], 4
          %s132 = int_to_ptr.vmem [resolvable:$true] %s131
          %137 = dma.hbm_to_vmem [thread:$0]  %s1, 4096, %s132, [#allocation6], 128, 128, 8
        $region16: #{tpu_custom_call.1} parent=11 // pred_fallthru
          _
        // Predicated region
        $region17: #{tpu_custom_call.1} parent=11 // pred_check
          %p138 = pneg %p84
        $region18: #{tpu_custom_call.1} parent=11 // pred_check_branch
          %140 = sbr.rel (%p138) target = $region20
        $region19: #{tpu_custom_call.1} parent=11 // pred_region
          %s142 = ssub.s32 4096, 4096
          %143 = vsyncadd [#allocation6], %s142
          %s144 = sshll.u32 [#allocation7], 4
          %s145 = int_to_ptr.vmem [resolvable:$true] %s144
          %150 = dma.hbm_to_vmem [thread:$0]  %s2, 4096, %s145, [#allocation6], 128, 128, 8
        $region20: #{tpu_custom_call.1} parent=11 // pred_fallthru
          _
      $region12: #{tpu_custom_call.1} parent=5 // pred_fallthru
        _
      %p151 = scmp.lt.s32.totalorder %s16, 2
      // Predicated region
      $region21: #{tpu_custom_call.1} parent=5 // pred_check
        %p152 = pneg %p151
      $region22: #{tpu_custom_call.1} parent=5 // pred_check_branch
        %154 = sbr.rel (%p152) target = $region24
      $region23: #{tpu_custom_call.1} parent=5 // pred_region
        // Predicated region
        $region25: #{tpu_custom_call.1} parent=23 // pred_check
          %p155 = pneg %p36
        $region26: #{tpu_custom_call.1} parent=23 // pred_check_branch
          %157 = sbr.rel (%p155) target = $region28
        $region27: #{tpu_custom_call.1} parent=23 // pred_region
          %s158 = sand.u32 %s26, 1
          %s159 = scalar_lea.sflag [#allocation3], %s158
          %s160 = sand.u32 %s26, 1
          %s161 = smul.addr %s160, 8
          %s162 = scalar_lea.vmem [#allocation2], %s161
          %s164 = ssub.s32 128, 128
          %165 = vsyncadd %s159, %s164
          %s166 = smul.addr %s16, 2
          %s167 = smul.addr %s166, 64
          %s168 = scalar_lea.hbm %s0, %s167
          %s170 = sshll.u32 %s162, 4
          %s171 = int_to_ptr.vmem [resolvable:$true] %s170
          %173 = dma.hbm_to_vmem [thread:$0]  %s168, 128, %s171, %s159
        $region28: #{tpu_custom_call.1} parent=23 // pred_fallthru
          _
      $region24: #{tpu_custom_call.1} parent=5 // pred_fallthru
        _
      %p174 = scmp.le.s32.totalorder 1, %s16
      %p175 = scmp.lt.s32.totalorder %s16, 3
      %p176 = pnand %p174, %p175
      %p177 = pneg %p176
      // Predicated region
      $region29: #{tpu_custom_call.1} parent=5 // pred_check
        _
      $region30: #{tpu_custom_call.1} parent=5 // pred_check_branch
        %179 = sbr.rel (%p176) target = $region32
      $region31: #{tpu_custom_call.1} parent=5 // pred_region
        %s180 = ssub.s32 %s16, 1
        %s181 = sand.u32 %s29, 1
        %s182 = scalar_lea.sflag [#allocation3], %s181
        %s183 = sand.u32 %s29, 1
        %s184 = smul.addr %s183, 8
        %s185 = scalar_lea.vmem [#allocation2], %s184
        // Predicated region
        $region33: #{tpu_custom_call.1} parent=31 // pred_check
          %p186 = pneg %p42
        $region34: #{tpu_custom_call.1} parent=31 // pred_check_branch
          %188 = sbr.rel (%p186) target = $region36
        $region35: #{tpu_custom_call.1} parent=31 // pred_region
          %189 = dma.done %s182, 128
        $region36: #{tpu_custom_call.1} parent=31 // pred_fallthru
          _
        // Predicated region
        $region37: #{tpu_custom_call.1} parent=31 // pred_check
          %p190 = pneg %p63
        $region38: #{tpu_custom_call.1} parent=31 // pred_check_branch
          %192 = sbr.rel (%p190) target = $region40
        $region39: #{tpu_custom_call.1} parent=31 // pred_region
          %193 = dma.done [#allocation6], 4096
        $region40: #{tpu_custom_call.1} parent=31 // pred_fallthru
          _
        // Predicated region
        $region41: #{tpu_custom_call.1} parent=31 // pred_check
          %p194 = pneg %p84
        $region42: #{tpu_custom_call.1} parent=31 // pred_check_branch
          %196 = sbr.rel (%p194) target = $region44
        $region43: #{tpu_custom_call.1} parent=31 // pred_region
          %197 = dma.done [#allocation6], 4096
        $region44: #{tpu_custom_call.1} parent=31 // pred_fallthru
          _
        %s198 = sand.u32 %s29, 1
        %s199 = scalar_lea.sflag [#allocation3], %s198
        %s200 = sand.u32 %s29, 1
        %s201 = smul.addr %s200, 8
        %s202 = scalar_lea.vmem [#allocation2], %s201
        %p203 = pneg %p42
        %p204 = pneg %p39
        %p205 = pneg %p63
        %p206 = pneg %p60
        %p207 = pneg %p84
        %p208 = pneg %p81
        %p209 = pneg %p110
        %p210 = pneg %p107
        %s211 = sand.u32 %s97, 1
        %s212 = scalar_lea.sflag [#allocation4], %s211
        %s213 = sand.u32 %s97, 1
        %s214 = smul.addr %s213, 16
        %s215 = scalar_lea.vmem [#allocation8], %s214
        %v216 = vld [vmem:[%s185] sm:$0xff]
        %v217 = vld [vmem:[#allocation5] sm:$0xff]
        %v218 = vld [vmem:[#allocation5 + $0x8] sm:$0xff]
        %v219 = vld [vmem:[#allocation5 + $0x10] sm:$0xff]
        %v220 = vld [vmem:[#allocation5 + $0x18] sm:$0xff]
        %v221 = vld [vmem:[#allocation5 + $0x20] sm:$0xff]
        %v222 = vld [vmem:[#allocation5 + $0x28] sm:$0xff]
        %v223 = vld [vmem:[#allocation5 + $0x30] sm:$0xff]
        %v224 = vld [vmem:[#allocation5 + $0x38] sm:$0xff]
        %v225 = vld [vmem:[#allocation5 + $0x40] sm:$0xff]
        %v226 = vld [vmem:[#allocation5 + $0x48] sm:$0xff]
        %v227 = vld [vmem:[#allocation5 + $0x50] sm:$0xff]
        %v228 = vld [vmem:[#allocation5 + $0x58] sm:$0xff]
        %v229 = vld [vmem:[#allocation5 + $0x60] sm:$0xff]
        %v230 = vld [vmem:[#allocation5 + $0x68] sm:$0xff]
        %v231 = vld [vmem:[#allocation5 + $0x70] sm:$0xff]
        %v232 = vld [vmem:[#allocation5 + $0x78] sm:$0xff]
        %v233 = vld [vmem:[#allocation5 + $0x80] sm:$0xff]
        %v234 = vld [vmem:[#allocation5 + $0x88] sm:$0xff]
        %v235 = vld [vmem:[#allocation5 + $0x90] sm:$0xff]
        %v236 = vld [vmem:[#allocation5 + $0x98] sm:$0xff]
        %v237 = vld [vmem:[#allocation5 + $0xa0] sm:$0xff]
        %v238 = vld [vmem:[#allocation5 + $0xa8] sm:$0xff]
        %v239 = vld [vmem:[#allocation5 + $0xb0] sm:$0xff]
        %v240 = vld [vmem:[#allocation5 + $0xb8] sm:$0xff]
        %v241 = vld [vmem:[#allocation5 + $0xc0] sm:$0xff]
        %v242 = vld [vmem:[#allocation5 + $0xc8] sm:$0xff]
        %v243 = vld [vmem:[#allocation5 + $0xd0] sm:$0xff]
        %v244 = vld [vmem:[#allocation5 + $0xd8] sm:$0xff]
        %v245 = vld [vmem:[#allocation5 + $0xe0] sm:$0xff]
        %v246 = vld [vmem:[#allocation5 + $0xe8] sm:$0xff]
        %v247 = vld [vmem:[#allocation5 + $0xf0] sm:$0xff]
        %v248 = vld [vmem:[#allocation5 + $0xf8] sm:$0xff]
        %v250 = vunpack.c.l.b16 %v216
        %v251 = vunpack.c.h.b16 %v216
        %v252 = vpack.c.b16 %v250, %v250
        %v253 = vpack.c.b16 %v251, %v251
        %v288 = vunpack.c.l.b16 %v217
        %v289 = vunpack.c.h.b16 %v217
        %v290 = vunpack.c.l.b16 %v218
        %v291 = vunpack.c.h.b16 %v218
        %v292 = vunpack.c.l.b16 %v219
        %v293 = vunpack.c.h.b16 %v219
        %v294 = vunpack.c.l.b16 %v220
        %v295 = vunpack.c.h.b16 %v220
        %v296 = vunpack.c.l.b16 %v221
        %v297 = vunpack.c.h.b16 %v221
        %v298 = vunpack.c.l.b16 %v222
        %v299 = vunpack.c.h.b16 %v222
        %v300 = vunpack.c.l.b16 %v223
        %v301 = vunpack.c.h.b16 %v223
        %v302 = vunpack.c.l.b16 %v224
        %v303 = vunpack.c.h.b16 %v224
        %v304 = vunpack.c.l.b16 %v225
        %v305 = vunpack.c.h.b16 %v225
        %v306 = vunpack.c.l.b16 %v226
        %v307 = vunpack.c.h.b16 %v226
        %v308 = vunpack.c.l.b16 %v227
        %v309 = vunpack.c.h.b16 %v227
        %v310 = vunpack.c.l.b16 %v228
        %v311 = vunpack.c.h.b16 %v228
        %v312 = vunpack.c.l.b16 %v229
        %v313 = vunpack.c.h.b16 %v229
        %v314 = vunpack.c.l.b16 %v230
        %v315 = vunpack.c.h.b16 %v230
        %v316 = vunpack.c.l.b16 %v231
        %v317 = vunpack.c.h.b16 %v231
        %v318 = vunpack.c.l.b16 %v232
        %v319 = vunpack.c.h.b16 %v232
        %v320 = vunpack.c.l.b16 %v233
        %v321 = vunpack.c.h.b16 %v233
        %v322 = vunpack.c.l.b16 %v234
        %v323 = vunpack.c.h.b16 %v234
        %v324 = vunpack.c.l.b16 %v235
        %v325 = vunpack.c.h.b16 %v235
        %v326 = vunpack.c.l.b16 %v236
        %v327 = vunpack.c.h.b16 %v236
        %v328 = vunpack.c.l.b16 %v237
        %v329 = vunpack.c.h.b16 %v237
        %v330 = vunpack.c.l.b16 %v238
        %v331 = vunpack.c.h.b16 %v238
        %v332 = vunpack.c.l.b16 %v239
        %v333 = vunpack.c.h.b16 %v239
        %v334 = vunpack.c.l.b16 %v240
        %v335 = vunpack.c.h.b16 %v240
        %v336 = vunpack.c.l.b16 %v241
        %v337 = vunpack.c.h.b16 %v241
        %v338 = vunpack.c.l.b16 %v242
        %v339 = vunpack.c.h.b16 %v242
        %v340 = vunpack.c.l.b16 %v243
        %v341 = vunpack.c.h.b16 %v243
        %v342 = vunpack.c.l.b16 %v244
        %v343 = vunpack.c.h.b16 %v244
        %v344 = vunpack.c.l.b16 %v245
        %v345 = vunpack.c.h.b16 %v245
        %v346 = vunpack.c.l.b16 %v246
        %v347 = vunpack.c.h.b16 %v246
        %v348 = vunpack.c.l.b16 %v247
        %v349 = vunpack.c.h.b16 %v247
        %v350 = vunpack.c.l.b16 %v248
        %v351 = vunpack.c.h.b16 %v248
        %v352 = vpack.c.b16 %v290, %v288
        %v353 = vpack.c.b16 %v291, %v289
        %v354 = vpack.c.b16 %v294, %v292
        %v355 = vpack.c.b16 %v295, %v293
        %v356 = vpack.c.b16 %v298, %v296
        %v357 = vpack.c.b16 %v299, %v297
        %v358 = vpack.c.b16 %v302, %v300
        %v359 = vpack.c.b16 %v303, %v301
        %v360 = vpack.c.b16 %v306, %v304
        %v361 = vpack.c.b16 %v307, %v305
        %v362 = vpack.c.b16 %v310, %v308
        %v363 = vpack.c.b16 %v311, %v309
        %v364 = vpack.c.b16 %v314, %v312
        %v365 = vpack.c.b16 %v315, %v313
        %v366 = vpack.c.b16 %v318, %v316
        %v367 = vpack.c.b16 %v319, %v317
        %v368 = vpack.c.b16 %v322, %v320
        %v369 = vpack.c.b16 %v323, %v321
        %v370 = vpack.c.b16 %v326, %v324
        %v371 = vpack.c.b16 %v327, %v325
        %v372 = vpack.c.b16 %v330, %v328
        %v373 = vpack.c.b16 %v331, %v329
        %v374 = vpack.c.b16 %v334, %v332
        %v375 = vpack.c.b16 %v335, %v333
        %v376 = vpack.c.b16 %v338, %v336
        %v377 = vpack.c.b16 %v339, %v337
        %v378 = vpack.c.b16 %v342, %v340
        %v379 = vpack.c.b16 %v343, %v341
        %v380 = vpack.c.b16 %v346, %v344
        %v381 = vpack.c.b16 %v347, %v345
        %v382 = vpack.c.b16 %v350, %v348
        %v383 = vpack.c.b16 %v351, %v349
        %416 = vmatprep.subr.bf16.mxu0 %v353
        %417 = vmatpush1.bf16.msra.mxu0 %v352
        %418 = vmatprep.subr.bf16.mxu0 %v355
        %419 = vmatpush1.bf16.msra.mxu0 %v354
        %420 = vmatprep.subr.bf16.mxu0 %v357
        %421 = vmatpush1.bf16.msra.mxu0 %v356
        %422 = vmatprep.subr.bf16.mxu0 %v359
        %423 = vmatpush1.bf16.msra.mxu0 %v358
        %424 = vmatprep.subr.bf16.mxu0 %v361
        %425 = vmatpush1.bf16.msra.mxu0 %v360
        %426 = vmatprep.subr.bf16.mxu0 %v363
        %427 = vmatpush1.bf16.msra.mxu0 %v362
        %428 = vmatprep.subr.bf16.mxu0 %v365
        %429 = vmatpush1.bf16.msra.mxu0 %v364
        %430 = vmatprep.subr.bf16.mxu0 %v367
        %431 = vmatpush1.bf16.msra.mxu0 %v366
        %432 = vmatprep.subr.bf16.mxu0 %v369
        %433 = vmatpush1.bf16.msra.mxu0 %v368
        %434 = vmatprep.subr.bf16.mxu0 %v371
        %435 = vmatpush1.bf16.msra.mxu0 %v370
        %436 = vmatprep.subr.bf16.mxu0 %v373
        %437 = vmatpush1.bf16.msra.mxu0 %v372
        %438 = vmatprep.subr.bf16.mxu0 %v375
        %439 = vmatpush1.bf16.msra.mxu0 %v374
        %440 = vmatprep.subr.bf16.mxu0 %v377
        %441 = vmatpush1.bf16.msra.mxu0 %v376
        %442 = vmatprep.subr.bf16.mxu0 %v379
        %443 = vmatpush1.bf16.msra.mxu0 %v378
        %444 = vmatprep.subr.bf16.mxu0 %v381
        %445 = vmatpush1.bf16.msra.mxu0 %v380
        %446 = vmatprep.subr.bf16.mxu0 %v383
        %447 = vmatpush1.bf16.msra.mxu0 %v382
        %448 = vmatprep.mubr.bf16.mxu0 %v253
        %449 = vmatmul.mubr.bf16.gmra.mrb[0].mxu0 %v252
        %v450 = vpop.f32.mrb[0].mxu0
        %v451 = vadd.f32 0.0, %v450
        %v452 = vpop.f32.mrb[0].mxu0
        %v453 = vadd.f32 0.0, %v452
        %v454 = vpop.f32.mrb[0].mxu0
        %v455 = vpop.f32.mrb[0].mxu0
        %456 = vdwg.mxu0
        %v457 = vmax.f32 %v451, -0.5
        %v458 = vmax.f32 %v453, -0.5
        %v459 = vmin.f32 %v457, 0.5
        %v460 = vmin.f32 %v458, 0.5
        %v461 = vsub.f32 %v451, %v459
        %v462 = vsub.f32 %v453, %v460
        %v463 = vpack.c.bf16 %v461, %v461
        %v464 = vpack.c.bf16 %v462, %v462
        %v465 = vld [vmem:[#allocation7] sm:$0xff]
        %v466 = vld [vmem:[#allocation7 + $0x8] sm:$0xff]
        %v467 = vld [vmem:[#allocation7 + $0x10] sm:$0xff]
        %v468 = vld [vmem:[#allocation7 + $0x18] sm:$0xff]
        %v469 = vld [vmem:[#allocation7 + $0x20] sm:$0xff]
        %v470 = vld [vmem:[#allocation7 + $0x28] sm:$0xff]
        %v471 = vld [vmem:[#allocation7 + $0x30] sm:$0xff]
        %v472 = vld [vmem:[#allocation7 + $0x38] sm:$0xff]
        %v473 = vld [vmem:[#allocation7 + $0x40] sm:$0xff]
        %v474 = vld [vmem:[#allocation7 + $0x48] sm:$0xff]
        %v475 = vld [vmem:[#allocation7 + $0x50] sm:$0xff]
        %v476 = vld [vmem:[#allocation7 + $0x58] sm:$0xff]
        %v477 = vld [vmem:[#allocation7 + $0x60] sm:$0xff]
        %v478 = vld [vmem:[#allocation7 + $0x68] sm:$0xff]
        %v479 = vld [vmem:[#allocation7 + $0x70] sm:$0xff]
        %v480 = vld [vmem:[#allocation7 + $0x78] sm:$0xff]
        %v481 = vld [vmem:[#allocation7 + $0x80] sm:$0xff]
        %v482 = vld [vmem:[#allocation7 + $0x88] sm:$0xff]
        %v483 = vld [vmem:[#allocation7 + $0x90] sm:$0xff]
        %v484 = vld [vmem:[#allocation7 + $0x98] sm:$0xff]
        %v485 = vld [vmem:[#allocation7 + $0xa0] sm:$0xff]
        %v486 = vld [vmem:[#allocation7 + $0xa8] sm:$0xff]
        %v487 = vld [vmem:[#allocation7 + $0xb0] sm:$0xff]
        %v488 = vld [vmem:[#allocation7 + $0xb8] sm:$0xff]
        %v489 = vld [vmem:[#allocation7 + $0xc0] sm:$0xff]
        %v490 = vld [vmem:[#allocation7 + $0xc8] sm:$0xff]
        %v491 = vld [vmem:[#allocation7 + $0xd0] sm:$0xff]
        %v492 = vld [vmem:[#allocation7 + $0xd8] sm:$0xff]
        %v493 = vld [vmem:[#allocation7 + $0xe0] sm:$0xff]
        %v494 = vld [vmem:[#allocation7 + $0xe8] sm:$0xff]
        %v495 = vld [vmem:[#allocation7 + $0xf0] sm:$0xff]
        %v496 = vld [vmem:[#allocation7 + $0xf8] sm:$0xff]
        %v529 = vunpack.c.l.b16 %v465
        %v530 = vunpack.c.h.b16 %v465
        %v531 = vunpack.c.l.b16 %v466
        %v532 = vunpack.c.h.b16 %v466
        %v533 = vunpack.c.l.b16 %v467
        %v534 = vunpack.c.h.b16 %v467
        %v535 = vunpack.c.l.b16 %v468
        %v536 = vunpack.c.h.b16 %v468
        %v537 = vunpack.c.l.b16 %v469
        %v538 = vunpack.c.h.b16 %v469
        %v539 = vunpack.c.l.b16 %v470
        %v540 = vunpack.c.h.b16 %v470
        %v541 = vunpack.c.l.b16 %v471
        %v542 = vunpack.c.h.b16 %v471
        %v543 = vunpack.c.l.b16 %v472
        %v544 = vunpack.c.h.b16 %v472
        %v545 = vunpack.c.l.b16 %v473
        %v546 = vunpack.c.h.b16 %v473
        %v547 = vunpack.c.l.b16 %v474
        %v548 = vunpack.c.h.b16 %v474
        %v549 = vunpack.c.l.b16 %v475
        %v550 = vunpack.c.h.b16 %v475
        %v551 = vunpack.c.l.b16 %v476
        %v552 = vunpack.c.h.b16 %v476
        %v553 = vunpack.c.l.b16 %v477
        %v554 = vunpack.c.h.b16 %v477
        %v555 = vunpack.c.l.b16 %v478
        %v556 = vunpack.c.h.b16 %v478
        %v557 = vunpack.c.l.b16 %v479
        %v558 = vunpack.c.h.b16 %v479
        %v559 = vunpack.c.l.b16 %v480
        %v560 = vunpack.c.h.b16 %v480
        %v561 = vunpack.c.l.b16 %v481
        %v562 = vunpack.c.h.b16 %v481
        %v563 = vunpack.c.l.b16 %v482
        %v564 = vunpack.c.h.b16 %v482
        %v565 = vunpack.c.l.b16 %v483
        %v566 = vunpack.c.h.b16 %v483
        %v567 = vunpack.c.l.b16 %v484
        %v568 = vunpack.c.h.b16 %v484
        %v569 = vunpack.c.l.b16 %v485
        %v570 = vunpack.c.h.b16 %v485
        %v571 = vunpack.c.l.b16 %v486
        %v572 = vunpack.c.h.b16 %v486
        %v573 = vunpack.c.l.b16 %v487
        %v574 = vunpack.c.h.b16 %v487
        %v575 = vunpack.c.l.b16 %v488
        %v576 = vunpack.c.h.b16 %v488
        %v577 = vunpack.c.l.b16 %v489
        %v578 = vunpack.c.h.b16 %v489
        %v579 = vunpack.c.l.b16 %v490
        %v580 = vunpack.c.h.b16 %v490
        %v581 = vunpack.c.l.b16 %v491
        %v582 = vunpack.c.h.b16 %v491
        %v583 = vunpack.c.l.b16 %v492
        %v584 = vunpack.c.h.b16 %v492
        %v585 = vunpack.c.l.b16 %v493
        %v586 = vunpack.c.h.b16 %v493
        %v587 = vunpack.c.l.b16 %v494
        %v588 = vunpack.c.h.b16 %v494
        %v589 = vunpack.c.l.b16 %v495
        %v590 = vunpack.c.h.b16 %v495
        %v591 = vunpack.c.l.b16 %v496
        %v592 = vunpack.c.h.b16 %v496
        %v593 = vpack.c.b16 %v531, %v529
        %v594 = vpack.c.b16 %v532, %v530
        %v595 = vpack.c.b16 %v535, %v533
        %v596 = vpack.c.b16 %v536, %v534
        %v597 = vpack.c.b16 %v539, %v537
        %v598 = vpack.c.b16 %v540, %v538
        %v599 = vpack.c.b16 %v543, %v541
        %v600 = vpack.c.b16 %v544, %v542
        %v601 = vpack.c.b16 %v547, %v545
        %v602 = vpack.c.b16 %v548, %v546
        %v603 = vpack.c.b16 %v551, %v549
        %v604 = vpack.c.b16 %v552, %v550
        %v605 = vpack.c.b16 %v555, %v553
        %v606 = vpack.c.b16 %v556, %v554
        %v607 = vpack.c.b16 %v559, %v557
        %v608 = vpack.c.b16 %v560, %v558
        %v609 = vpack.c.b16 %v563, %v561
        %v610 = vpack.c.b16 %v564, %v562
        %v611 = vpack.c.b16 %v567, %v565
        %v612 = vpack.c.b16 %v568, %v566
        %v613 = vpack.c.b16 %v571, %v569
        %v614 = vpack.c.b16 %v572, %v570
        %v615 = vpack.c.b16 %v575, %v573
        %v616 = vpack.c.b16 %v576, %v574
        %v617 = vpack.c.b16 %v579, %v577
        %v618 = vpack.c.b16 %v580, %v578
        %v619 = vpack.c.b16 %v583, %v581
        %v620 = vpack.c.b16 %v584, %v582
        %v621 = vpack.c.b16 %v587, %v585
        %v622 = vpack.c.b16 %v588, %v586
        %v623 = vpack.c.b16 %v591, %v589
        %v624 = vpack.c.b16 %v592, %v590
        %657 = vmatprep.subr.bf16.mxu0 %v594
        %658 = vmatpush1.bf16.msra.mxu0 %v593
        %659 = vmatprep.subr.bf16.mxu0 %v596
        %660 = vmatpush1.bf16.msra.mxu0 %v595
        %661 = vmatprep.subr.bf16.mxu0 %v598
        %662 = vmatpush1.bf16.msra.mxu0 %v597
        %663 = vmatprep.subr.bf16.mxu0 %v600
        %664 = vmatpush1.bf16.msra.mxu0 %v599
        %665 = vmatprep.subr.bf16.mxu0 %v602
        %666 = vmatpush1.bf16.msra.mxu0 %v601
        %667 = vmatprep.subr.bf16.mxu0 %v604
        %668 = vmatpush1.bf16.msra.mxu0 %v603
        %669 = vmatprep.subr.bf16.mxu0 %v606
        %670 = vmatpush1.bf16.msra.mxu0 %v605
        %671 = vmatprep.subr.bf16.mxu0 %v608
        %672 = vmatpush1.bf16.msra.mxu0 %v607
        %673 = vmatprep.subr.bf16.mxu0 %v610
        %674 = vmatpush1.bf16.msra.mxu0 %v609
        %675 = vmatprep.subr.bf16.mxu0 %v612
        %676 = vmatpush1.bf16.msra.mxu0 %v611
        %677 = vmatprep.subr.bf16.mxu0 %v614
        %678 = vmatpush1.bf16.msra.mxu0 %v613
        %679 = vmatprep.subr.bf16.mxu0 %v616
        %680 = vmatpush1.bf16.msra.mxu0 %v615
        %681 = vmatprep.subr.bf16.mxu0 %v618
        %682 = vmatpush1.bf16.msra.mxu0 %v617
        %683 = vmatprep.subr.bf16.mxu0 %v620
        %684 = vmatpush1.bf16.msra.mxu0 %v619
        %685 = vmatprep.subr.bf16.mxu0 %v622
        %686 = vmatpush1.bf16.msra.mxu0 %v621
        %687 = vmatprep.subr.bf16.mxu0 %v624
        %688 = vmatpush1.bf16.msra.mxu0 %v623
        %689 = vmatprep.mubr.bf16.mxu0 %v464
        %690 = vmatmul.mubr.bf16.gmra.mrb[0].mxu0 %v463
        %v691 = vpop.f32.mrb[0].mxu0
        %v692 = vadd.f32 0.0, %v691
        %v693 = vpop.f32.mrb[0].mxu0
        %v694 = vadd.f32 0.0, %v693
        %v695 = vpop.f32.mrb[0].mxu0
        %v696 = vpop.f32.mrb[0].mxu0
        %697 = vdwg.mxu0
        %v698 = vunpack.c.l.bf16 %v216
        %v699 = vunpack.c.h.bf16 %v216
        %v700 = vsub.f32 %v692, %v698
        %v701 = vsub.f32 %v694, %v699
        %702 = vst [vmem:[%s215] sm:$0xff] %v700
        %703 = vst [vmem:[%s215 + $0x8] sm:$0xff] %v701
        %s704 = sand.u32 %s97, 1
        %s705 = scalar_lea.sflag [#allocation4], %s704
        %s706 = sand.u32 %s97, 1
        %s707 = smul.addr %s706, 16
        %s708 = scalar_lea.vmem [#allocation8], %s707
        // Predicated region
        $region45: #{tpu_custom_call.1} parent=31 // pred_check
          %p709 = pneg %p107
        $region46: #{tpu_custom_call.1} parent=31 // pred_check_branch
          %711 = sbr.rel (%p709) target = $region48
        $region47: #{tpu_custom_call.1} parent=31 // pred_region
          %s713 = ssub.s32 256, 256
          %714 = vsyncadd %s705, %s713
          %s715 = smul.addr %s21, 2
          %s716 = smul.addr %s715, 128
          %s717 = scalar_lea.hbm %s3, %s716
          %s719 = sshll.u32 %s708, 4
          %s720 = int_to_ptr.vmem [resolvable:$true] %s719
          %722 = dma.vmem_to_hbm [thread:$0]  %s720, 256, %s717, %s705
        $region48: #{tpu_custom_call.1} parent=31 // pred_fallthru
          _
      $region32: #{tpu_custom_call.1} parent=5 // pred_fallthru
        _
      %p723 = scmp.le.s32.totalorder 2, %s16
      // Predicated region
      $region49: #{tpu_custom_call.1} parent=5 // pred_check
        %p724 = pneg %p723
      $region50: #{tpu_custom_call.1} parent=5 // pred_check_branch
        %726 = sbr.rel (%p724) target = $region52
      $region51: #{tpu_custom_call.1} parent=5 // pred_region
        %s727 = ssub.s32 %s16, 2
        // Predicated region
        $region53: #{tpu_custom_call.1} parent=51 // pred_check
          %p728 = pneg %p113
        $region54: #{tpu_custom_call.1} parent=51 // pred_check_branch
          %730 = sbr.rel (%p728) target = $region56
        $region55: #{tpu_custom_call.1} parent=51 // pred_region
          %s731 = sand.u32 %s98, 1
          %s732 = scalar_lea.sflag [#allocation4], %s731
          %s733 = sand.u32 %s98, 1
          %s734 = smul.addr %s733, 16
          %s735 = scalar_lea.vmem [#allocation8], %s734
          %736 = dma.done %s732, 256
        $region56: #{tpu_custom_call.1} parent=51 // pred_fallthru
          _
      $region52: #{tpu_custom_call.1} parent=5 // pred_fallthru
        _
    $region6: #{tpu_custom_call.1} parent=1 // loop_footer
      %s20 = sadd.s32 1, %s16
    $region7: #{tpu_custom_call.1} parent=1 // loop_footer_branch
      %15 = sbr.rel target = $region3
    $region8: #{tpu_custom_call.1} parent=1 // loop_exit
      _
    %737 = vsyncpa [#allocation3], 1
    %s738 = scalar_lea.sflag [#allocation3], 1
    %739 = vsyncpa %s738, 1
    %740 = vsyncpa [#allocation6], 1
    %741 = vsyncpa [#allocation4], 1
    %s742 = scalar_lea.sflag [#allocation4], 1
    %743 = vsyncpa %s742, 1

// kernel: tpu_custom_call.1
$region0: #{tpu_custom_call.1}
  #allocation0 [shape = 'u32[]', space=smem, size = 0x4, offset = 0x4, fixed_abs, tag = 'smem constant byte address 0x4 - core index']
  #allocation1 [shape = 'u32[144,128]{1,0:T(1,128)}', space=vmem, size = 0x12000, scoped, tag = 'internal scratch']
  %s0 = inlined_call_operand.hbm [shape: bf16[16,256], index: 0, kind: input, shape index: {}]
  %s1 = inlined_call_operand.hbm [shape: bf16[256,256], index: 1, kind: input, shape index: {}]
  %s2 = inlined_call_operand.hbm [shape: bf16[256,256], index: 2, kind: input, shape index: {}]
  %s3 = inlined_call_operand.hbm [shape: f32[16,256], index: 3, kind: output, shape index: {}]
  %s4 = sld [smem:[#allocation0]]
  $region57: #{tpu_custom_call.1} parent=0
    _
  %s6 = ssub.s32 1, %s4
  %s7 = scalar_select 0, %s6, %s4
  $region1: #{tpu_custom_call.1} parent=0
    #allocation2 [shape = 'u8[8192]{0}', space=vmem, size = 0x2000, scoped, tag = 'input window, operand 0']
    #allocation3 [shape = 's32[2]{0}', space=sflag, size = 0x8, scoped, tag = 'scoped memory for tpu_custom_call.1']
    #allocation4 [shape = 's32[2]{0}', space=sflag, size = 0x8, scoped, tag = 'scoped memory for tpu_custom_call.1']
    #allocation5 [shape = 'u8[131072]{0}', space=vmem, size = 0x20000, scoped, tag = 'input window, operand 1, single buffered']
    #allocation6 [shape = 's32[1]{0}', space=sflag, size = 0x4, scoped, tag = 'scoped memory for tpu_custom_call.1']
    #allocation7 [shape = 'u8[131072]{0}', space=vmem, size = 0x20000, scoped, tag = 'input window, operand 2, single buffered']
    #allocation8 [shape = 'u8[16384]{0}', space=vmem, size = 0x4000, scoped, tag = 'output window, operand 0']
    %8 = vsyncpa [#allocation3], 0
    %s9 = scalar_lea.sflag [#allocation3], 1
    %10 = vsyncpa %s9, 0
    %11 = vsyncpa [#allocation6], 0
    %12 = vsyncpa [#allocation4], 0
    %s13 = scalar_lea.sflag [#allocation4], 1
    %14 = vsyncpa %s13, 0
    loop: start=0, step=1, limit=4
    $region2: #{tpu_custom_call.1} parent=1 // loop_pre_header
      _
    $region3: #{tpu_custom_call.1} parent=1 // loop_header
      %s16 = sphi 0, %s20
      %p17 = scmp.ge.s32.totalorder %s16, 4
      %s26 = sphi 0, %s28
      %s29 = sphi 0, %s26
      %s30 = sphi 0, %s29
      %s46 = sphi 0, %s30
      %s50 = sphi 0, %s50
      %s52 = sphi 0, %s50
      %s53 = sphi 0, %s52
      %s67 = sphi 0, %s53
      %s71 = sphi 0, %s71
      %s73 = sphi 0, %s71
      %s74 = sphi 0, %s73
      %s88 = sphi 0, %s74
      %s94 = sphi 0, %s96
      %s97 = sphi 0, %s94
      %s98 = sphi 0, %s97
      %s114 = sphi 0, %s98
    $region4: #{tpu_custom_call.1} parent=1 // loop_header_branch
      %19 = sbr.rel (%p17) target = $region8
    $region5: #{tpu_custom_call.1} parent=1 // loop_body
      %s21 = ssub.s32 %s16, 1
      %s22 = ssub.s32 %s16, 2
      %s23 = sadd.s32 %s16, 1
      %s24 = ssub.s32 %s16, %s23
      %p25 = scmp.eq.s32.totalorder %s24, 0
      %s27 = sadd.s32 %s26, 1
      %s28 = scalar_select %p25, %s26, %s27
      %p31 = pneg %p25
      %p32 = scmp.eq.s32.totalorder %s16, 1
      %p33 = por %p31, %p32
      %p34 = scmp.ne.s32.totalorder %s26, %s29
      %p35 = scmp.eq.s32.totalorder %s16, 0
      %p36 = por %p34, %p35
      %p37 = scmp.ne.s32.totalorder %s26, %s29
      %p38 = scmp.eq.s32.totalorder %s21, 1
      %p39 = por %p37, %p38
      %p40 = scmp.ne.s32.totalorder %s29, %s30
      %p41 = scmp.eq.s32.totalorder %s21, 0
      %p42 = por %p40, %p41
      %p43 = scmp.ne.s32.totalorder %s29, %s30
      %p44 = scmp.eq.s32.totalorder %s22, 1
      %p45 = por %p43, %p44
      %p47 = scmp.ne.s32.totalorder %s30, %s46
      %p48 = scmp.eq.s32.totalorder %s22, 0
      %p49 = por %p47, %p48
      %s51 = sadd.s32 %s50, 1
      %p54 = scmp.eq.s32.totalorder %s16, 1
      %p55 = scmp.ne.s32.totalorder %s50, %s52
      %p56 = scmp.eq.s32.totalorder %s16, 0
      %p57 = por %p55, %p56
      %p58 = scmp.ne.s32.totalorder %s50, %s52
      %p59 = scmp.eq.s32.totalorder %s21, 1
      %p60 = por %p58, %p59
      %p61 = scmp.ne.s32.totalorder %s52, %s53
      %p62 = scmp.eq.s32.totalorder %s21, 0
      %p63 = por %p61, %p62
      %p64 = scmp.ne.s32.totalorder %s52, %s53
      %p65 = scmp.eq.s32.totalorder %s22, 1
      %p66 = por %p64, %p65
      %p68 = scmp.ne.s32.totalorder %s53, %s67
      %p69 = scmp.eq.s32.totalorder %s22, 0
      %p70 = por %p68, %p69
      %s72 = sadd.s32 %s71, 1
      %p75 = scmp.eq.s32.totalorder %s16, 1
      %p76 = scmp.ne.s32.totalorder %s71, %s73
      %p77 = scmp.eq.s32.totalorder %s16, 0
      %p78 = por %p76, %p77
      %p79 = scmp.ne.s32.totalorder %s71, %s73
      %p80 = scmp.eq.s32.totalorder %s21, 1
      %p81 = por %p79, %p80
      %p82 = scmp.ne.s32.totalorder %s73, %s74
      %p83 = scmp.eq.s32.totalorder %s21, 0
      %p84 = por %p82, %p83
      %p85 = scmp.ne.s32.totalorder %s73, %s74
      %p86 = scmp.eq.s32.totalorder %s22, 1
      %p87 = por %p85, %p86
      %p89 = scmp.ne.s32.totalorder %s74, %s88
      %p90 = scmp.eq.s32.totalorder %s22, 0
      %p91 = por %p89, %p90
      %s92 = ssub.s32 %s16, %s23
      %p93 = scmp.eq.s32.totalorder %s92, 0
      %s95 = sadd.s32 %s94, 1
      %s96 = scalar_select %p93, %s94, %s95
      %p99 = pneg %p93
      %p100 = scmp.eq.s32.totalorder %s16, 1
      %p101 = por %p99, %p100
      %p102 = scmp.ne.s32.totalorder %s94, %s97
      %p103 = scmp.eq.s32.totalorder %s16, 0
      %p104 = por %p102, %p103
      %p105 = scmp.ne.s32.totalorder %s94, %s97
      %p106 = scmp.eq.s32.totalorder %s21, 1
      %p107 = por %p105, %p106
      %p108 = scmp.ne.s32.totalorder %s97, %s98
      %p109 = scmp.eq.s32.totalorder %s21, 0
      %p110 = por %p108, %p109
      %p111 = scmp.ne.s32.totalorder %s97, %s98
      %p112 = scmp.eq.s32.totalorder %s22, 1
      %p113 = por %p111, %p112
      %p115 = scmp.ne.s32.totalorder %s98, %s114
      %p116 = scmp.eq.s32.totalorder %s22, 0
      %p117 = por %p115, %p116
      %p118 = scmp.le.s32.totalorder 1, %s16
      %p119 = scmp.lt.s32.totalorder %s16, 3
      %p120 = pnand %p118, %p119
      %p121 = pneg %p120
      // Predicated region
      $region9: #{tpu_custom_call.1} parent=5 // pred_check
        _
      $region10: #{tpu_custom_call.1} parent=5 // pred_check_branch
        %123 = sbr.rel (%p120) target = $region12
      $region11: #{tpu_custom_call.1} parent=5 // pred_region
        %s124 = ssub.s32 %s16, 1
        // Predicated region
        $region13: #{tpu_custom_call.1} parent=11 // pred_check
          %p125 = pneg %p63
        $region14: #{tpu_custom_call.1} parent=11 // pred_check_branch
          %127 = sbr.rel (%p125) target = $region16
        $region15: #{tpu_custom_call.1} parent=11 // pred_region
          %s129 = ssub.s32 4096, 4096
          %130 = vsyncadd [#allocation6], %s129
          %s131 = sshll.u32 [#allocation5], 4
          %s132 = int_to_ptr.vmem [resolvable:$true] %s131
          %137 = dma.hbm_to_vmem [thread:$0]  %s1, 4096, %s132, [#allocation6], 128, 128, 8
        $region16: #{tpu_custom_call.1} parent=11 // pred_fallthru
          _
        // Predicated region
        $region17: #{tpu_custom_call.1} parent=11 // pred_check
          %p138 = pneg %p84
        $region18: #{tpu_custom_call.1} parent=11 // pred_check_branch
          %140 = sbr.rel (%p138) target = $region20
        $region19: #{tpu_custom_call.1} parent=11 // pred_region
          %s142 = ssub.s32 4096, 4096
          %143 = vsyncadd [#allocation6], %s142
          %s144 = sshll.u32 [#allocation7], 4
          %s145 = int_to_ptr.vmem [resolvable:$true] %s144
          %150 = dma.hbm_to_vmem [thread:$0]  %s2, 4096, %s145, [#allocation6], 128, 128, 8
        $region20: #{tpu_custom_call.1} parent=11 // pred_fallthru
          _
      $region12: #{tpu_custom_call.1} parent=5 // pred_fallthru
        _
      %p151 = scmp.lt.s32.totalorder %s16, 2
      // Predicated region
      $region21: #{tpu_custom_call.1} parent=5 // pred_check
        %p152 = pneg %p151
      $region22: #{tpu_custom_call.1} parent=5 // pred_check_branch
        %154 = sbr.rel (%p152) target = $region24
      $region23: #{tpu_custom_call.1} parent=5 // pred_region
        // Predicated region
        $region25: #{tpu_custom_call.1} parent=23 // pred_check
          %p155 = pneg %p36
        $region26: #{tpu_custom_call.1} parent=23 // pred_check_branch
          %157 = sbr.rel (%p155) target = $region28
        $region27: #{tpu_custom_call.1} parent=23 // pred_region
          %s158 = sand.u32 %s26, 1
          %s159 = scalar_lea.sflag [#allocation3], %s158
          %s160 = sand.u32 %s26, 1
          %s161 = smul.addr %s160, 8
          %s162 = scalar_lea.vmem [#allocation2], %s161
          %s164 = ssub.s32 128, 128
          %165 = vsyncadd %s159, %s164
          %s166 = smul.addr %s16, 2
          %s167 = smul.addr %s166, 64
          %s168 = scalar_lea.hbm %s0, %s167
          %s170 = sshll.u32 %s162, 4
          %s171 = int_to_ptr.vmem [resolvable:$true] %s170
          %173 = dma.hbm_to_vmem [thread:$0]  %s168, 128, %s171, %s159
        $region28: #{tpu_custom_call.1} parent=23 // pred_fallthru
          _
      $region24: #{tpu_custom_call.1} parent=5 // pred_fallthru
        _
      %p174 = scmp.le.s32.totalorder 1, %s16
      %p175 = scmp.lt.s32.totalorder %s16, 3
      %p176 = pnand %p174, %p175
      %p177 = pneg %p176
      // Predicated region
      $region29: #{tpu_custom_call.1} parent=5 // pred_check
        _
      $region30: #{tpu_custom_call.1} parent=5 // pred_check_branch
        %179 = sbr.rel (%p176) target = $region32
      $region31: #{tpu_custom_call.1} parent=5 // pred_region
        %s180 = ssub.s32 %s16, 1
        %s181 = sand.u32 %s29, 1
        %s182 = scalar_lea.sflag [#allocation3], %s181
        %s183 = sand.u32 %s29, 1
        %s184 = smul.addr %s183, 8
        %s185 = scalar_lea.vmem [#allocation2], %s184
        // Predicated region
        $region33: #{tpu_custom_call.1} parent=31 // pred_check
          %p186 = pneg %p42
        $region34: #{tpu_custom_call.1} parent=31 // pred_check_branch
          %188 = sbr.rel (%p186) target = $region36
        $region35: #{tpu_custom_call.1} parent=31 // pred_region
          %189 = dma.done %s182, 128
        $region36: #{tpu_custom_call.1} parent=31 // pred_fallthru
          _
        // Predicated region
        $region37: #{tpu_custom_call.1} parent=31 // pred_check
          %p190 = pneg %p63
        $region38: #{tpu_custom_call.1} parent=31 // pred_check_branch
          %192 = sbr.rel (%p190) target = $region40
        $region39: #{tpu_custom_call.1} parent=31 // pred_region
          %193 = dma.done [#allocation6], 4096
        $region40: #{tpu_custom_call.1} parent=31 // pred_fallthru
          _
        // Predicated region
        $region41: #{tpu_custom_call.1} parent=31 // pred_check
          %p194 = pneg %p84
        $region42: #{tpu_custom_call.1} parent=31 // pred_check_branch
          %196 = sbr.rel (%p194) target = $region44
        $region43: #{tpu_custom_call.1} parent=31 // pred_region
          %197 = dma.done [#allocation6], 4096
        $region44: #{tpu_custom_call.1} parent=31 // pred_fallthru
          _
        %s198 = sand.u32 %s29, 1
        %s199 = scalar_lea.sflag [#allocation3], %s198
        %s200 = sand.u32 %s29, 1
        %s201 = smul.addr %s200, 8
        %s202 = scalar_lea.vmem [#allocation2], %s201
        %p203 = pneg %p42
        %p204 = pneg %p39
        %p205 = pneg %p63
        %p206 = pneg %p60
        %p207 = pneg %p84
        %p208 = pneg %p81
        %p209 = pneg %p110
        %p210 = pneg %p107
        %s211 = sand.u32 %s97, 1
        %s212 = scalar_lea.sflag [#allocation4], %s211
        %s213 = sand.u32 %s97, 1
        %s214 = smul.addr %s213, 16
        %s215 = scalar_lea.vmem [#allocation8], %s214
        %v216 = vld [vmem:[%s185] sm:$0xff]
        %v217 = vld [vmem:[#allocation5] sm:$0xff]
        %v218 = vld [vmem:[#allocation5 + $0x8] sm:$0xff]
        %v219 = vld [vmem:[#allocation5 + $0x10] sm:$0xff]
        %v220 = vld [vmem:[#allocation5 + $0x18] sm:$0xff]
        %v221 = vld [vmem:[#allocation5 + $0x20] sm:$0xff]
        %v222 = vld [vmem:[#allocation5 + $0x28] sm:$0xff]
        %v223 = vld [vmem:[#allocation5 + $0x30] sm:$0xff]
        %v224 = vld [vmem:[#allocation5 + $0x38] sm:$0xff]
        %v225 = vld [vmem:[#allocation5 + $0x40] sm:$0xff]
        %v226 = vld [vmem:[#allocation5 + $0x48] sm:$0xff]
        %v227 = vld [vmem:[#allocation5 + $0x50] sm:$0xff]
        %v228 = vld [vmem:[#allocation5 + $0x58] sm:$0xff]
        %v229 = vld [vmem:[#allocation5 + $0x60] sm:$0xff]
        %v230 = vld [vmem:[#allocation5 + $0x68] sm:$0xff]
        %v231 = vld [vmem:[#allocation5 + $0x70] sm:$0xff]
        %v232 = vld [vmem:[#allocation5 + $0x78] sm:$0xff]
        %v233 = vld [vmem:[#allocation5 + $0x80] sm:$0xff]
        %v234 = vld [vmem:[#allocation5 + $0x88] sm:$0xff]
        %v235 = vld [vmem:[#allocation5 + $0x90] sm:$0xff]
        %v236 = vld [vmem:[#allocation5 + $0x98] sm:$0xff]
        %v237 = vld [vmem:[#allocation5 + $0xa0] sm:$0xff]
        %v238 = vld [vmem:[#allocation5 + $0xa8] sm:$0xff]
        %v239 = vld [vmem:[#allocation5 + $0xb0] sm:$0xff]
        %v240 = vld [vmem:[#allocation5 + $0xb8] sm:$0xff]
        %v241 = vld [vmem:[#allocation5 + $0xc0] sm:$0xff]
        %v242 = vld [vmem:[#allocation5 + $0xc8] sm:$0xff]
        %v243 = vld [vmem:[#allocation5 + $0xd0] sm:$0xff]
        %v244 = vld [vmem:[#allocation5 + $0xd8] sm:$0xff]
        %v245 = vld [vmem:[#allocation5 + $0xe0] sm:$0xff]
        %v246 = vld [vmem:[#allocation5 + $0xe8] sm:$0xff]
        %v247 = vld [vmem:[#allocation5 + $0xf0] sm:$0xff]
        %v248 = vld [vmem:[#allocation5 + $0xf8] sm:$0xff]
        %v250 = vunpack.c.l.b16 %v216
        %v251 = vunpack.c.h.b16 %v216
        %v252 = vpack.c.b16 %v250, %v250
        %v253 = vpack.c.b16 %v251, %v251
        %v288 = vunpack.c.l.b16 %v217
        %v289 = vunpack.c.h.b16 %v217
        %v290 = vunpack.c.l.b16 %v218
        %v291 = vunpack.c.h.b16 %v218
        %v292 = vunpack.c.l.b16 %v219
        %v293 = vunpack.c.h.b16 %v219
        %v294 = vunpack.c.l.b16 %v220
        %v295 = vunpack.c.h.b16 %v220
        %v296 = vunpack.c.l.b16 %v221
        %v297 = vunpack.c.h.b16 %v221
        %v298 = vunpack.c.l.b16 %v222
        %v299 = vunpack.c.h.b16 %v222
        %v300 = vunpack.c.l.b16 %v223
        %v301 = vunpack.c.h.b16 %v223
        %v302 = vunpack.c.l.b16 %v224
        %v303 = vunpack.c.h.b16 %v224
        %v304 = vunpack.c.l.b16 %v225
        %v305 = vunpack.c.h.b16 %v225
        %v306 = vunpack.c.l.b16 %v226
        %v307 = vunpack.c.h.b16 %v226
        %v308 = vunpack.c.l.b16 %v227
        %v309 = vunpack.c.h.b16 %v227
        %v310 = vunpack.c.l.b16 %v228
        %v311 = vunpack.c.h.b16 %v228
        %v312 = vunpack.c.l.b16 %v229
        %v313 = vunpack.c.h.b16 %v229
        %v314 = vunpack.c.l.b16 %v230
        %v315 = vunpack.c.h.b16 %v230
        %v316 = vunpack.c.l.b16 %v231
        %v317 = vunpack.c.h.b16 %v231
        %v318 = vunpack.c.l.b16 %v232
        %v319 = vunpack.c.h.b16 %v232
        %v320 = vunpack.c.l.b16 %v233
        %v321 = vunpack.c.h.b16 %v233
        %v322 = vunpack.c.l.b16 %v234
        %v323 = vunpack.c.h.b16 %v234
        %v324 = vunpack.c.l.b16 %v235
        %v325 = vunpack.c.h.b16 %v235
        %v326 = vunpack.c.l.b16 %v236
        %v327 = vunpack.c.h.b16 %v236
        %v328 = vunpack.c.l.b16 %v237
        %v329 = vunpack.c.h.b16 %v237
        %v330 = vunpack.c.l.b16 %v238
        %v331 = vunpack.c.h.b16 %v238
        %v332 = vunpack.c.l.b16 %v239
        %v333 = vunpack.c.h.b16 %v239
        %v334 = vunpack.c.l.b16 %v240
        %v335 = vunpack.c.h.b16 %v240
        %v336 = vunpack.c.l.b16 %v241
        %v337 = vunpack.c.h.b16 %v241
        %v338 = vunpack.c.l.b16 %v242
        %v339 = vunpack.c.h.b16 %v242
        %v340 = vunpack.c.l.b16 %v243
        %v341 = vunpack.c.h.b16 %v243
        %v342 = vunpack.c.l.b16 %v244
        %v343 = vunpack.c.h.b16 %v244
        %v344 = vunpack.c.l.b16 %v245
        %v345 = vunpack.c.h.b16 %v245
        %v346 = vunpack.c.l.b16 %v246
        %v347 = vunpack.c.h.b16 %v246
        %v348 = vunpack.c.l.b16 %v247
        %v349 = vunpack.c.h.b16 %v247
        %v350 = vunpack.c.l.b16 %v248
        %v351 = vunpack.c.h.b16 %v248
        %v352 = vpack.c.b16 %v290, %v288
        %v353 = vpack.c.b16 %v291, %v289
        %v354 = vpack.c.b16 %v294, %v292
        %v355 = vpack.c.b16 %v295, %v293
        %v356 = vpack.c.b16 %v298, %v296
        %v357 = vpack.c.b16 %v299, %v297
        %v358 = vpack.c.b16 %v302, %v300
        %v359 = vpack.c.b16 %v303, %v301
        %v360 = vpack.c.b16 %v306, %v304
        %v361 = vpack.c.b16 %v307, %v305
        %v362 = vpack.c.b16 %v310, %v308
        %v363 = vpack.c.b16 %v311, %v309
        %v364 = vpack.c.b16 %v314, %v312
        %v365 = vpack.c.b16 %v315, %v313
        %v366 = vpack.c.b16 %v318, %v316
        %v367 = vpack.c.b16 %v319, %v317
        %v368 = vpack.c.b16 %v322, %v320
        %v369 = vpack.c.b16 %v323, %v321
        %v370 = vpack.c.b16 %v326, %v324
        %v371 = vpack.c.b16 %v327, %v325
        %v372 = vpack.c.b16 %v330, %v328
        %v373 = vpack.c.b16 %v331, %v329
        %v374 = vpack.c.b16 %v334, %v332
        %v375 = vpack.c.b16 %v335, %v333
        %v376 = vpack.c.b16 %v338, %v336
        %v377 = vpack.c.b16 %v339, %v337
        %v378 = vpack.c.b16 %v342, %v340
        %v379 = vpack.c.b16 %v343, %v341
        %v380 = vpack.c.b16 %v346, %v344
        %v381 = vpack.c.b16 %v347, %v345
        %v382 = vpack.c.b16 %v350, %v348
        %v383 = vpack.c.b16 %v351, %v349
        %416 = vmatprep.subr.bf16.mxu0 %v353
        %417 = vmatpush1.bf16.msra.mxu0 %v352
        %418 = vmatprep.subr.bf16.mxu0 %v355
        %419 = vmatpush1.bf16.msra.mxu0 %v354
        %420 = vmatprep.subr.bf16.mxu0 %v357
        %421 = vmatpush1.bf16.msra.mxu0 %v356
        %422 = vmatprep.subr.bf16.mxu0 %v359
        %423 = vmatpush1.bf16.msra.mxu0 %v358
        %424 = vmatprep.subr.bf16.mxu0 %v361
        %425 = vmatpush1.bf16.msra.mxu0 %v360
        %426 = vmatprep.subr.bf16.mxu0 %v363
        %427 = vmatpush1.bf16.msra.mxu0 %v362
        %428 = vmatprep.subr.bf16.mxu0 %v365
        %429 = vmatpush1.bf16.msra.mxu0 %v364
        %430 = vmatprep.subr.bf16.mxu0 %v367
        %431 = vmatpush1.bf16.msra.mxu0 %v366
        %432 = vmatprep.subr.bf16.mxu0 %v369
        %433 = vmatpush1.bf16.msra.mxu0 %v368
        %434 = vmatprep.subr.bf16.mxu0 %v371
        %435 = vmatpush1.bf16.msra.mxu0 %v370
        %436 = vmatprep.subr.bf16.mxu0 %v373
        %437 = vmatpush1.bf16.msra.mxu0 %v372
        %438 = vmatprep.subr.bf16.mxu0 %v375
        %439 = vmatpush1.bf16.msra.mxu0 %v374
        %440 = vmatprep.subr.bf16.mxu0 %v377
        %441 = vmatpush1.bf16.msra.mxu0 %v376
        %442 = vmatprep.subr.bf16.mxu0 %v379
        %443 = vmatpush1.bf16.msra.mxu0 %v378
        %444 = vmatprep.subr.bf16.mxu0 %v381
        %445 = vmatpush1.bf16.msra.mxu0 %v380
        %446 = vmatprep.subr.bf16.mxu0 %v383
        %447 = vmatpush1.bf16.msra.mxu0 %v382
        %448 = vmatprep.mubr.bf16.mxu0 %v253
        %449 = vmatmul.mubr.bf16.gmra.mrb[0].mxu0 %v252
        %v450 = vpop.f32.mrb[0].mxu0
        %v451 = vadd.f32 0.0, %v450
        %v452 = vpop.f32.mrb[0].mxu0
        %v453 = vadd.f32 0.0, %v452
        %v454 = vpop.f32.mrb[0].mxu0
        %v455 = vpop.f32.mrb[0].mxu0
        %456 = vdwg.mxu0
        %v457 = vmax.f32 %v451, -0.5
        %v458 = vmax.f32 %v453, -0.5
        %v459 = vmin.f32 %v457, 0.5
        %v460 = vmin.f32 %v458, 0.5
        %v461 = vsub.f32 %v451, %v459
        %v462 = vsub.f32 %v453, %v460
        %v463 = vpack.c.bf16 %v461, %v461
        %v464 = vpack.c.bf16 %v462, %v462
        %v465 = vld [vmem:[#allocation7] sm:$0xff]
        %v466 = vld [vmem:[#allocation7 + $0x8] sm:$0xff]
        %v467 = vld [vmem:[#allocation7 + $0x10] sm:$0xff]
        %v468 = vld [vmem:[#allocation7 + $0x18] sm:$0xff]
        %v469 = vld [vmem:[#allocation7 + $0x20] sm:$0xff]
        %v470 = vld [vmem:[#allocation7 + $0x28] sm:$0xff]
        %v471 = vld [vmem:[#allocation7 + $0x30] sm:$0xff]
        %v472 = vld [vmem:[#allocation7 + $0x38] sm:$0xff]
        %v473 = vld [vmem:[#allocation7 + $0x40] sm:$0xff]
        %v474 = vld [vmem:[#allocation7 + $0x48] sm:$0xff]
        %v475 = vld [vmem:[#allocation7 + $0x50] sm:$0xff]
        %v476 = vld [vmem:[#allocation7 + $0x58] sm:$0xff]
        %v477 = vld [vmem:[#allocation7 + $0x60] sm:$0xff]
        %v478 = vld [vmem:[#allocation7 + $0x68] sm:$0xff]
        %v479 = vld [vmem:[#allocation7 + $0x70] sm:$0xff]
        %v480 = vld [vmem:[#allocation7 + $0x78] sm:$0xff]
        %v481 = vld [vmem:[#allocation7 + $0x80] sm:$0xff]
        %v482 = vld [vmem:[#allocation7 + $0x88] sm:$0xff]
        %v483 = vld [vmem:[#allocation7 + $0x90] sm:$0xff]
        %v484 = vld [vmem:[#allocation7 + $0x98] sm:$0xff]
        %v485 = vld [vmem:[#allocation7 + $0xa0] sm:$0xff]
        %v486 = vld [vmem:[#allocation7 + $0xa8] sm:$0xff]
        %v487 = vld [vmem:[#allocation7 + $0xb0] sm:$0xff]
        %v488 = vld [vmem:[#allocation7 + $0xb8] sm:$0xff]
        %v489 = vld [vmem:[#allocation7 + $0xc0] sm:$0xff]
        %v490 = vld [vmem:[#allocation7 + $0xc8] sm:$0xff]
        %v491 = vld [vmem:[#allocation7 + $0xd0] sm:$0xff]
        %v492 = vld [vmem:[#allocation7 + $0xd8] sm:$0xff]
        %v493 = vld [vmem:[#allocation7 + $0xe0] sm:$0xff]
        %v494 = vld [vmem:[#allocation7 + $0xe8] sm:$0xff]
        %v495 = vld [vmem:[#allocation7 + $0xf0] sm:$0xff]
        %v496 = vld [vmem:[#allocation7 + $0xf8] sm:$0xff]
        %v529 = vunpack.c.l.b16 %v465
        %v530 = vunpack.c.h.b16 %v465
        %v531 = vunpack.c.l.b16 %v466
        %v532 = vunpack.c.h.b16 %v466
        %v533 = vunpack.c.l.b16 %v467
        %v534 = vunpack.c.h.b16 %v467
        %v535 = vunpack.c.l.b16 %v468
        %v536 = vunpack.c.h.b16 %v468
        %v537 = vunpack.c.l.b16 %v469
        %v538 = vunpack.c.h.b16 %v469
        %v539 = vunpack.c.l.b16 %v470
        %v540 = vunpack.c.h.b16 %v470
        %v541 = vunpack.c.l.b16 %v471
        %v542 = vunpack.c.h.b16 %v471
        %v543 = vunpack.c.l.b16 %v472
        %v544 = vunpack.c.h.b16 %v472
        %v545 = vunpack.c.l.b16 %v473
        %v546 = vunpack.c.h.b16 %v473
        %v547 = vunpack.c.l.b16 %v474
        %v548 = vunpack.c.h.b16 %v474
        %v549 = vunpack.c.l.b16 %v475
        %v550 = vunpack.c.h.b16 %v475
        %v551 = vunpack.c.l.b16 %v476
        %v552 = vunpack.c.h.b16 %v476
        %v553 = vunpack.c.l.b16 %v477
        %v554 = vunpack.c.h.b16 %v477
        %v555 = vunpack.c.l.b16 %v478
        %v556 = vunpack.c.h.b16 %v478
        %v557 = vunpack.c.l.b16 %v479
        %v558 = vunpack.c.h.b16 %v479
        %v559 = vunpack.c.l.b16 %v480
        %v560 = vunpack.c.h.b16 %v480
        %v561 = vunpack.c.l.b16 %v481
        %v562 = vunpack.c.h.b16 %v481
        %v563 = vunpack.c.l.b16 %v482
        %v564 = vunpack.c.h.b16 %v482
        %v565 = vunpack.c.l.b16 %v483
        %v566 = vunpack.c.h.b16 %v483
        %v567 = vunpack.c.l.b16 %v484
        %v568 = vunpack.c.h.b16 %v484
        %v569 = vunpack.c.l.b16 %v485
        %v570 = vunpack.c.h.b16 %v485
        %v571 = vunpack.c.l.b16 %v486
        %v572 = vunpack.c.h.b16 %v486
        %v573 = vunpack.c.l.b16 %v487
        %v574 = vunpack.c.h.b16 %v487
        %v575 = vunpack.c.l.b16 %v488
        %v576 = vunpack.c.h.b16 %v488
        %v577 = vunpack.c.l.b16 %v489
        %v578 = vunpack.c.h.b16 %v489
        %v579 = vunpack.c.l.b16 %v490
        %v580 = vunpack.c.h.b16 %v490
        %v581 = vunpack.c.l.b16 %v491
        %v582 = vunpack.c.h.b16 %v491
        %v583 = vunpack.c.l.b16 %v492
        %v584 = vunpack.c.h.b16 %v492
        %v585 = vunpack.c.l.b16 %v493
        %v586 = vunpack.c.h.b16 %v493
        %v587 = vunpack.c.l.b16 %v494
        %v588 = vunpack.c.h.b16 %v494
        %v589 = vunpack.c.l.b16 %v495
        %v590 = vunpack.c.h.b16 %v495
        %v591 = vunpack.c.l.b16 %v496
        %v592 = vunpack.c.h.b16 %v496
        %v593 = vpack.c.b16 %v531, %v529
        %v594 = vpack.c.b16 %v532, %v530
        %v595 = vpack.c.b16 %v535, %v533
        %v596 = vpack.c.b16 %v536, %v534
        %v597 = vpack.c.b16 %v539, %v537
        %v598 = vpack.c.b16 %v540, %v538
        %v599 = vpack.c.b16 %v543, %v541
        %v600 = vpack.c.b16 %v544, %v542
        %v601 = vpack.c.b16 %v547, %v545
        %v602 = vpack.c.b16 %v548, %v546
        %v603 = vpack.c.b16 %v551, %v549
        %v604 = vpack.c.b16 %v552, %v550
        %v605 = vpack.c.b16 %v555, %v553
        %v606 = vpack.c.b16 %v556, %v554
        %v607 = vpack.c.b16 %v559, %v557
        %v608 = vpack.c.b16 %v560, %v558
        %v609 = vpack.c.b16 %v563, %v561
        %v610 = vpack.c.b16 %v564, %v562
        %v611 = vpack.c.b16 %v567, %v565
        %v612 = vpack.c.b16 %v568, %v566
        %v613 = vpack.c.b16 %v571, %v569
        %v614 = vpack.c.b16 %v572, %v570
        %v615 = vpack.c.b16 %v575, %v573
        %v616 = vpack.c.b16 %v576, %v574
        %v617 = vpack.c.b16 %v579, %v577
        %v618 = vpack.c.b16 %v580, %v578
        %v619 = vpack.c.b16 %v583, %v581
        %v620 = vpack.c.b16 %v584, %v582
        %v621 = vpack.c.b16 %v587, %v585
        %v622 = vpack.c.b16 %v588, %v586
        %v623 = vpack.c.b16 %v591, %v589
        %v624 = vpack.c.b16 %v592, %v590
        %657 = vmatprep.subr.bf16.mxu0 %v594
        %658 = vmatpush1.bf16.msra.mxu0 %v593
        %659 = vmatprep.subr.bf16.mxu0 %v596
        %660 = vmatpush1.bf16.msra.mxu0 %v595
        %661 = vmatprep.subr.bf16.mxu0 %v598
        %662 = vmatpush1.bf16.msra.mxu0 %v597
        %663 = vmatprep.subr.bf16.mxu0 %v600
        %664 = vmatpush1.bf16.msra.mxu0 %v599
        %665 = vmatprep.subr.bf16.mxu0 %v602
        %666 = vmatpush1.bf16.msra.mxu0 %v601
        %667 = vmatprep.subr.bf16.mxu0 %v604
        %668 = vmatpush1.bf16.msra.mxu0 %v603
        %669 = vmatprep.subr.bf16.mxu0 %v606
        %670 = vmatpush1.bf16.msra.mxu0 %v605
        %671 = vmatprep.subr.bf16.mxu0 %v608
        %672 = vmatpush1.bf16.msra.mxu0 %v607
        %673 = vmatprep.subr.bf16.mxu0 %v610
        %674 = vmatpush1.bf16.msra.mxu0 %v609
        %675 = vmatprep.subr.bf16.mxu0 %v612
        %676 = vmatpush1.bf16.msra.mxu0 %v611
        %677 = vmatprep.subr.bf16.mxu0 %v614
        %678 = vmatpush1.bf16.msra.mxu0 %v613
        %679 = vmatprep.subr.bf16.mxu0 %v616
        %680 = vmatpush1.bf16.msra.mxu0 %v615
        %681 = vmatprep.subr.bf16.mxu0 %v618
        %682 = vmatpush1.bf16.msra.mxu0 %v617
        %683 = vmatprep.subr.bf16.mxu0 %v620
        %684 = vmatpush1.bf16.msra.mxu0 %v619
        %685 = vmatprep.subr.bf16.mxu0 %v622
        %686 = vmatpush1.bf16.msra.mxu0 %v621
        %687 = vmatprep.subr.bf16.mxu0 %v624
        %688 = vmatpush1.bf16.msra.mxu0 %v623
        %689 = vmatprep.mubr.bf16.mxu0 %v464
        %690 = vmatmul.mubr.bf16.gmra.mrb[0].mxu0 %v463
        %v691 = vpop.f32.mrb[0].mxu0
        %v692 = vadd.f32 0.0, %v691
        %v693 = vpop.f32.mrb[0].mxu0
        %v694 = vadd.f32 0.0, %v693
        %v695 = vpop.f32.mrb[0].mxu0
        %v696 = vpop.f32.mrb[0].mxu0
        %697 = vdwg.mxu0
        %v698 = vunpack.c.l.bf16 %v216
        %v699 = vunpack.c.h.bf16 %v216
        %v700 = vsub.f32 %v692, %v698
        %v701 = vsub.f32 %v694, %v699
        %702 = vst [vmem:[%s215] sm:$0xff] %v700
        %703 = vst [vmem:[%s215 + $0x8] sm:$0xff] %v701
        %s704 = sand.u32 %s97, 1
        %s705 = scalar_lea.sflag [#allocation4], %s704
        %s706 = sand.u32 %s97, 1
        %s707 = smul.addr %s706, 16
        %s708 = scalar_lea.vmem [#allocation8], %s707
        // Predicated region
        $region45: #{tpu_custom_call.1} parent=31 // pred_check
          %p709 = pneg %p107
        $region46: #{tpu_custom_call.1} parent=31 // pred_check_branch
          %711 = sbr.rel (%p709) target = $region48
        $region47: #{tpu_custom_call.1} parent=31 // pred_region
          %s713 = ssub.s32 256, 256
          %714 = vsyncadd %s705, %s713
          %s715 = smul.addr %s21, 2
          %s716 = smul.addr %s715, 128
          %s717 = scalar_lea.hbm %s3, %s716
          %s719 = sshll.u32 %s708, 4
          %s720 = int_to_ptr.vmem [resolvable:$true] %s719
          %722 = dma.vmem_to_hbm [thread:$0]  %s720, 256, %s717, %s705
        $region48: #{tpu_custom_call.1} parent=31 // pred_fallthru
          _
      $region32: #{tpu_custom_call.1} parent=5 // pred_fallthru
        _
      %p723 = scmp.le.s32.totalorder 2, %s16
      // Predicated region
      $region49: #{tpu_custom_call.1} parent=5 // pred_check
        %p724 = pneg %p723
      $region50: #{tpu_custom_call.1} parent=5 // pred_check_branch
        %726 = sbr.rel (%p724) target = $region52
      $region51: #{tpu_custom_call.1} parent=5 // pred_region
        %s727 = ssub.s32 %s16, 2
        // Predicated region
        $region53: #{tpu_custom_call.1} parent=51 // pred_check
          %p728 = pneg %p113
        $region54: #{tpu_custom_call.1} parent=51 // pred_check_branch
          %730 = sbr.rel (%p728) target = $region56
        $region55: #{tpu_custom_call.1} parent=51 // pred_region
          %s731 = sand.u32 %s98, 1
          %s732 = scalar_lea.sflag [#allocation4], %s731
          %s733 = sand.u32 %s98, 1
          %s734 = smul.addr %s733, 16
          %s735 = scalar_lea.vmem [#allocation8], %s734
          %736 = dma.done %s732, 256
        $region56: #{tpu_custom_call.1} parent=51 // pred_fallthru
          _
      $region52: #{tpu_custom_call.1} parent=5 // pred_fallthru
        _
    $region6: #{tpu_custom_call.1} parent=1 // loop_footer
      %s20 = sadd.s32 1, %s16
    $region7: #{tpu_custom_call.1} parent=1 // loop_footer_branch
      %15 = sbr.rel target = $region3
    $region8: #{tpu_custom_call.1} parent=1 // loop_exit
      _
    %737 = vsyncpa [#allocation3], 1
    %s738 = scalar_lea.sflag [#allocation3], 1
    %739 = vsyncpa %s738, 1
    %740 = vsyncpa [#allocation6], 1
    %741 = vsyncpa [#allocation4], 1
    %s742 = scalar_lea.sflag [#allocation4], 1
    %743 = vsyncpa %s742, 1

</llo_original>
